<compile_context>
chip_gen: v7x
topology: tpu7x:2x2x1
jax: 0.10.0
libtpu: 0.0.40
codegen_flags: <defaults>
</compile_context>

<pallas_src>
import functools

import jax
import jax.numpy as jnp
from jax.experimental import pallas as pl
from jax.experimental.pallas import tpu as pltpu


def _round_up(x, m):
    return (x + m - 1) // m * m


# ------------------------------ fused kernel ------------------------------- #

def _projection_head_kernel(*refs, p_dim, ln_eps, training):
    if training:
        x_ref, mask_ref, w1_ref, w2_ref, params_ref, o_ref = refs
    else:
        x_ref, w1_ref, w2_ref, params_ref, o_ref = refs

    b1 = params_ref[0:1, :]     # (1, Pp)
    b2 = params_ref[1:2, :]
    gamma = params_ref[2:3, :]
    beta = params_ref[3:4, :]

    # ---- projection = x @ W1^T + b1  (bf16 MXU operands, f32 accumulate) ----
    proj = jnp.dot(x_ref[...], w1_ref[...], preferred_element_type=jnp.float32) + b1

    # ---- GELU ----
    # TODO(synk): nn.GELU() default is the exact erf formulation; tanh approximation
    # used in-kernel (no guaranteed Mosaic erf lowering); ~1e-3 abs deviation.
    c0 = 0.7978845608028654  # sqrt(2/pi)
    g = 0.5 * proj * (1.0 + jnp.tanh(c0 * (proj + 0.044715 * proj * proj * proj)))

    # ---- fc = gelu @ W2^T + b2 ----
    h = jnp.dot(g.astype(jnp.bfloat16), w2_ref[...],
                preferred_element_type=jnp.float32) + b2

    # ---- dropout (training): precomputed keep/scale mask, elementwise multiply ----
    if training:
        h = h * mask_ref[...].astype(jnp.float32)

    # ---- residual ----
    y = h + proj

    # ---- LayerNorm over the feature axis (padding-aware when P not 128-aligned) ----
    Pp = y.shape[-1]
    if Pp == p_dim:
        mean = jnp.mean(y, axis=-1, keepdims=True)
        cent = y - mean
        var = jnp.mean(cent * cent, axis=-1, keepdims=True)
    else:
        col = jax.lax.broadcasted_iota(jnp.int32, y.shape, 1)
        m = (col < p_dim).astype(jnp.float32)
        inv_n = 1.0 / p_dim
        mean = jnp.sum(y * m, axis=-1, keepdims=True) * inv_n
        cent = (y - mean) * m
        var = jnp.sum(cent * cent, axis=-1, keepdims=True) * inv_n
    inv_std = jax.lax.rsqrt(var + ln_eps)
    o_ref[...] = (cent * inv_std * gamma + beta).astype(o_ref.dtype)


# ------------------------------ module wrapper ------------------------------ #

class PallasProjectionHead:
    def __init__(self, embedding_dim, projection_dim=256, dropout=0.2, *,
                 key, out_dtype=jnp.bfloat16):
        self.embedding_dim = embedding_dim
        self.projection_dim = projection_dim
        self.dropout_p = float(dropout)
        self.out_dtype = out_dtype

        def _linear_init(k, out_f, in_f):
            kw, kb = jax.random.split(k)
            bound = 1.0 / (in_f ** 0.5)
            w = jax.random.uniform(kw, (out_f, in_f), jnp.float32, -bound, bound)
            b = jax.random.uniform(kb, (out_f,), jnp.float32, -bound, bound)
            return w, b

        k1, k2, k3 = jax.random.split(key, 3)
        self.w1, self.b1 = _linear_init(k1, projection_dim, embedding_dim)   # self.projection
        self.w2, self.b2 = _linear_init(k2, projection_dim, projection_dim)  # self.fc
        # LayerNorm params (PyTorch inits ones/zeros; randomized slightly so the
        # affine path is actually exercised by the check).
        kg, kb = jax.random.split(k3)
        self.gamma = 1.0 + 0.1 * jax.random.normal(kg, (projection_dim,), jnp.float32)
        self.beta = 0.1 * jax.random.normal(kb, (projection_dim,), jnp.float32)

        # ---- prepack ONCE: transpose + pad; matmul operands to bf16 ----
        # NOTE(v6e/v7x): a K (=Ep) that is a multiple of 256 fully feeds the
        # 2x256^2 MXU; only relevant if this kernel ever becomes compute-bound.
        Ep = _round_up(embedding_dim, 128)
        Pp = _round_up(projection_dim, 128)
        self.Ep, self.Pp = Ep, Pp
        self.w1t_p = (jnp.zeros((Ep, Pp), jnp.bfloat16)
                      .at[:embedding_dim, :projection_dim]
                      .set(self.w1.T.astype(jnp.bfloat16)))
        self.w2t_p = (jnp.zeros((Pp, Pp), jnp.bfloat16)
                      .at[:projection_dim, :projection_dim]
                      .set(self.w2.T.astype(jnp.bfloat16)))
        # b1 / b2 / gamma / beta packed into one (8, Pp) grid-invariant block.
        params = jnp.zeros((8, Pp), jnp.float32)
        params = params.at[0, :projection_dim].set(self.b1)
        params = params.at[1, :projection_dim].set(self.b2)
        params = params.at[2, :projection_dim].set(self.gamma)
        params = params.at[3, :projection_dim].set(self.beta)
        self.params_p = params

    def __call__(self, x, *, training=False, rng=None):
        lead_shape = x.shape[:-1]
        E = x.shape[-1]
        assert E == self.embedding_dim
        P, Ep, Pp = self.projection_dim, self.Ep, self.Pp

        x2 = x.reshape(-1, E)
        M = x2.shape[0]

        # Zero-copy fast path when the feature dim is already lane-aligned
        # (no wrapper-side pad/scatter HBM pass).
        if E == Ep:
            xk = x2.astype(jnp.bfloat16)
        else:
            xk = jnp.zeros((M, Ep), jnp.bfloat16).at[:, :E].set(x2.astype(jnp.bfloat16))

        # Row tile: large tiles for HBM-roofline efficiency; cap so the parallel
        # grid has >= 2 steps (v7x has 2 TensorCores sharding the parallel axis).
        if M >= 4096:
            TM = 1024
        elif M >= 512:
            TM = 512
        else:
            TM = _round_up(max(M, 1), 8)
        if pl.cdiv(M, TM) < 2 and M >= 16:
            TM = max(8, _round_up(pl.cdiv(M, 2), 8))
        grid = (pl.cdiv(M, TM),)       # ragged last row tile handled by Pallas

        use_mask = training and self.dropout_p > 0.0

        in_specs = [pl.BlockSpec((TM, Ep), lambda i: (i, 0))]   # x row tile
        args = [xk]
        if use_mask:
            if rng is None:
                rng = jax.random.PRNGKey(0)
            keep = jax.random.bernoulli(rng, 1.0 - self.dropout_p, (M, Pp))
            mask = jnp.where(keep, 1.0 / (1.0 - self.dropout_p), 0.0).astype(jnp.bfloat16)
            in_specs.append(pl.BlockSpec((TM, Pp), lambda i: (i, 0)))
            args.append(mask)
        in_specs += [
            pl.BlockSpec((Ep, Pp), lambda i: (0, 0)),   # W1^T (grid-invariant, resident)
            pl.BlockSpec((Pp, Pp), lambda i: (0, 0)),   # W2^T (grid-invariant, resident)
            pl.BlockSpec((8, Pp), lambda i: (0, 0)),    # packed b1/b2/gamma/beta
        ]
        args += [self.w1t_p, self.w2t_p, self.params_p]

        # Explicit VMEM budget from actual buffer sizes (covers v5e 16 MiB scoped
        # default; clamped to v7x's 64 MiB physical).
        out_bytes = jnp.dtype(self.out_dtype).itemsize
        needed = (2 * TM * Ep * 2          # x tile (bf16, double-buffered)
                  + 2 * Ep * Pp * 2        # W1
                  + 2 * Pp * Pp * 2        # W2
                  + 2 * 8 * Pp * 4         # packed params
                  + 2 * TM * Pp * out_bytes  # out tile
                  + 8 * TM * Pp * 4)       # f32 intermediates (proj/g/h/y/cent/...)
        if use_mask:
            needed += 2 * TM * Pp * 2
        vmem_limit = min(max(int(needed * 1.5), 32 * 1024 * 1024), 64 * 1024 * 1024)

        kernel = functools.partial(_projection_head_kernel,
                                   p_dim=P, ln_eps=1e-5, training=use_mask)

        out = pl.pallas_call(
            kernel,
            out_shape=jax.ShapeDtypeStruct((M, Pp), self.out_dtype),
            grid=grid,
            in_specs=in_specs,
            out_specs=pl.BlockSpec((TM, Pp), lambda i: (i, 0)),
            compiler_params=pltpu.CompilerParams(
                dimension_semantics=("parallel",),
                vmem_limit_bytes=vmem_limit),
        )(*args)

        if Pp != P:
            out = out[:, :P]
        return out.reshape(*lead_shape, P)


# ---------------------------------- demo ------------------------------------ #

if __name__ == "__main__":
    EMBED_DIM = 128     # 128-aligned -> zero-copy fast path (no pad / slice passes)
    PROJ_DIM = 256      # module default projection_dim (always 128-aligned)
    BATCH = 8

    root = jax.random.PRNGKey(0)
    k_params, k_x = jax.random.split(root)
    head = PallasProjectionHead(EMBED_DIM, PROJ_DIM, dropout=0.2, key=k_params)
    x = jax.random.normal(k_x, (BATCH, EMBED_DIM), jnp.float32)

    # inference mode (Dropout = identity) — checked against a pure-JAX reference
    out = head(x, training=False)
    jax.block_until_ready(out)

    proj = x @ head.w1.T + head.b1
    g = jax.nn.gelu(proj, approximate=False)        # exact erf GELU (nn.GELU default)
    h = g @ head.w2.T + head.b2
    y = h + proj
    mean = y.mean(-1, keepdims=True)
    var = ((y - mean) ** 2).mean(-1, keepdims=True)
    ref = (y - mean) / jnp.sqrt(var + 1e-5) * head.gamma + head.beta

    assert out.shape == (BATCH, PROJ_DIM)
    out_f32 = out.astype(jnp.float32)
    max_err = float(jnp.max(jnp.abs(out_f32 - ref)))
    assert jnp.allclose(out_f32, ref, atol=5e-2, rtol=5e-2), f"max_err={max_err}"

    # training mode: host-generated Bernoulli(1-p)/(1-p) mask applied in-kernel
    # (different RNG stream than torch, same dropout semantics) — sanity check only.
    out_tr = head(x, training=True, rng=jax.random.PRNGKey(42))
    jax.block_until_ready(out_tr)
    assert out_tr.shape == (BATCH, PROJ_DIM)
    assert bool(jnp.isfinite(out_tr.astype(jnp.float32)).all())

    print("KERNEL_OK")
</pallas_src>

<mosaic_0001>
module attributes {stable_mosaic.version = 11 : i64} {
  func.func @_projection_head_kernel(%arg0: i32, %arg1: memref<8x128xbf16, #tpu.memory_space<vmem>>, %arg2: memref<128x256xbf16, #tpu.memory_space<vmem>>, %arg3: memref<256x256xbf16, #tpu.memory_space<vmem>>, %arg4: memref<8x256xf32, #tpu.memory_space<vmem>>, %arg5: memref<8x256xbf16, #tpu.memory_space<vmem>>) attributes {dimension_semantics = [#tpu.dimension_semantics<parallel>], iteration_bounds = array<i64: 1>, scalar_prefetch = 0 : i64, scratch_operands = 0 : i64, tpu.core_type = #tpu.core_type<tc>, window_params = [{transform_indices = @transform_0, window_bounds = array<i64: 8, 128>}, {pipeline_mode = #tpu.pipeline_mode<synchronous>, transform_indices = @transform_1, window_bounds = array<i64: 128, 256>}, {pipeline_mode = #tpu.pipeline_mode<synchronous>, transform_indices = @transform_2, window_bounds = array<i64: 256, 256>}, {pipeline_mode = #tpu.pipeline_mode<synchronous>, transform_indices = @transform_3, window_bounds = array<i64: 8, 256>}, {transform_indices = @transform_4, window_bounds = array<i64: 8, 256>}]} {
    %c0 = arith.constant 0 : index
    %c0_0 = arith.constant 0 : index
    %0 = vector.load %arg4[%c0, %c0_0] : memref<8x256xf32, #tpu.memory_space<vmem>>, vector<1x256xf32>
    %c1 = arith.constant 1 : index
    %c0_1 = arith.constant 0 : index
    %1 = vector.load %arg4[%c1, %c0_1] : memref<8x256xf32, #tpu.memory_space<vmem>>, vector<1x256xf32>
    %c2 = arith.constant 2 : index
    %c0_2 = arith.constant 0 : index
    %2 = vector.load %arg4[%c2, %c0_2] : memref<8x256xf32, #tpu.memory_space<vmem>>, vector<1x256xf32>
    %c3 = arith.constant 3 : index
    %c0_3 = arith.constant 0 : index
    %3 = vector.load %arg4[%c3, %c0_3] : memref<8x256xf32, #tpu.memory_space<vmem>>, vector<1x256xf32>
    %c0_4 = arith.constant 0 : index
    %c0_5 = arith.constant 0 : index
    %4 = vector.load %arg1[%c0_4, %c0_5] : memref<8x128xbf16, #tpu.memory_space<vmem>>, vector<8x128xbf16>
    %c0_6 = arith.constant 0 : index
    %c0_7 = arith.constant 0 : index
    %5 = vector.load %arg2[%c0_6, %c0_7] : memref<128x256xbf16, #tpu.memory_space<vmem>>, vector<128x256xbf16>
    %cst = arith.constant dense<0.000000e+00> : vector<8x256xf32>
    %6 = tpu.matmul %4, %5, %cst {dimension_numbers = #tpu.dot_dimension_numbers<[1], [0], [0], [1], [0, 0, 1, 1], [], []>} : vector<8x128xbf16>, vector<128x256xbf16>, vector<8x256xf32> -> vector<8x256xf32>
    %7 = vector.broadcast %0 : vector<1x256xf32> to vector<8x256xf32>
    %8 = arith.addf %6, %7 : vector<8x256xf32>
    %cst_8 = arith.constant 5.000000e-01 : f32
    %9 = vector.broadcast %cst_8 : f32 to vector<8x256xf32>
    %10 = arith.mulf %9, %8 : vector<8x256xf32>
    %cst_9 = arith.constant 4.471500e-02 : f32
    %11 = vector.broadcast %cst_9 : f32 to vector<8x256xf32>
    %12 = arith.mulf %11, %8 : vector<8x256xf32>
    %13 = arith.mulf %12, %8 : vector<8x256xf32>
    %14 = arith.mulf %13, %8 : vector<8x256xf32>
    %15 = arith.addf %8, %14 : vector<8x256xf32>
    %cst_10 = arith.constant 0.797884583 : f32
    %16 = vector.broadcast %cst_10 : f32 to vector<8x256xf32>
    %17 = arith.mulf %16, %15 : vector<8x256xf32>
    %18 = math.tanh %17 : vector<8x256xf32>
    %cst_11 = arith.constant 1.000000e+00 : f32
    %19 = vector.broadcast %cst_11 : f32 to vector<8x256xf32>
    %20 = arith.addf %19, %18 : vector<8x256xf32>
    %21 = arith.mulf %10, %20 : vector<8x256xf32>
    %22 = arith.truncf %21 : vector<8x256xf32> to vector<8x256xbf16>
    %c0_12 = arith.constant 0 : index
    %c0_13 = arith.constant 0 : index
    %23 = vector.load %arg3[%c0_12, %c0_13] : memref<256x256xbf16, #tpu.memory_space<vmem>>, vector<256x256xbf16>
    %cst_14 = arith.constant dense<0.000000e+00> : vector<8x256xf32>
    %24 = tpu.matmul %22, %23, %cst_14 {dimension_numbers = #tpu.dot_dimension_numbers<[1], [0], [0], [1], [0, 0, 1, 1], [], []>} : vector<8x256xbf16>, vector<256x256xbf16>, vector<8x256xf32> -> vector<8x256xf32>
    %25 = vector.broadcast %1 : vector<1x256xf32> to vector<8x256xf32>
    %26 = arith.addf %24, %25 : vector<8x256xf32>
    %27 = arith.addf %26, %8 : vector<8x256xf32>
    %cst_15 = arith.constant dense<0.000000e+00> : vector<8xf32>
    %28 = vector.multi_reduction <add>, %27, %cst_15 [1] : vector<8x256xf32> to vector<8xf32>
    %29 = vector.shape_cast %28 : vector<8xf32> to vector<8x1xf32>
    %cst_16 = arith.constant 2.560000e+02 : f32
    %30 = vector.broadcast %cst_16 : f32 to vector<8x1xf32>
    %31 = arith.divf %29, %30 : vector<8x1xf32>
    %32 = vector.broadcast %31 : vector<8x1xf32> to vector<8x256xf32>
    %33 = arith.subf %27, %32 : vector<8x256xf32>
    %34 = arith.mulf %33, %33 : vector<8x256xf32>
    %cst_17 = arith.constant dense<0.000000e+00> : vector<8xf32>
    %35 = vector.multi_reduction <add>, %34, %cst_17 [1] : vector<8x256xf32> to vector<8xf32>
    %36 = vector.shape_cast %35 : vector<8xf32> to vector<8x1xf32>
    %cst_18 = arith.constant 2.560000e+02 : f32
    %37 = vector.broadcast %cst_18 : f32 to vector<8x1xf32>
    %38 = arith.divf %36, %37 : vector<8x1xf32>
    %cst_19 = arith.constant 9.99999974E-6 : f32
    %39 = vector.broadcast %cst_19 : f32 to vector<8x1xf32>
    %40 = arith.addf %38, %39 : vector<8x1xf32>
    %41 = math.rsqrt %40 : vector<8x1xf32>
    %42 = vector.broadcast %41 : vector<8x1xf32> to vector<8x256xf32>
    %43 = arith.mulf %33, %42 : vector<8x256xf32>
    %44 = vector.broadcast %2 : vector<1x256xf32> to vector<8x256xf32>
    %45 = arith.mulf %43, %44 : vector<8x256xf32>
    %46 = vector.broadcast %3 : vector<1x256xf32> to vector<8x256xf32>
    %47 = arith.addf %45, %46 : vector<8x256xf32>
    %48 = arith.truncf %47 : vector<8x256xf32> to vector<8x256xbf16>
    %c0_20 = arith.constant 0 : index
    %c0_21 = arith.constant 0 : index
    %49 = vector.load %arg5[%c0_20, %c0_21] : memref<8x256xbf16, #tpu.memory_space<vmem>>, vector<8x256xbf16>
    tpu.vector_store %arg5[%c0_20, %c0_21], %48 {strides = array<i32>} : memref<8x256xbf16, #tpu.memory_space<vmem>>, vector<8x256xbf16>,
    return
  }
  func.func @transform_0(%arg0: i32) -> (i32, i32) {
    %c0_i32 = arith.constant 0 : i32
    %c0_i32_0 = arith.constant 0 : i32
    return %arg0, %c0_i32 : i32, i32
  }
  func.func @transform_1(%arg0: i32) -> (i32, i32) {
    %c0_i32 = arith.constant 0 : i32
    %c0_i32_0 = arith.constant 0 : i32
    %c0_i32_1 = arith.constant 0 : i32
    return %c0_i32, %c0_i32_0 : i32, i32
  }
  func.func @transform_2(%arg0: i32) -> (i32, i32) {
    %c0_i32 = arith.constant 0 : i32
    %c0_i32_0 = arith.constant 0 : i32
    %c0_i32_1 = arith.constant 0 : i32
    return %c0_i32, %c0_i32_0 : i32, i32
  }
  func.func @transform_3(%arg0: i32) -> (i32, i32) {
    %c0_i32 = arith.constant 0 : i32
    %c0_i32_0 = arith.constant 0 : i32
    %c0_i32_1 = arith.constant 0 : i32
    return %c0_i32, %c0_i32_0 : i32, i32
  }
  func.func @transform_4(%arg0: i32) -> (i32, i32) {
    %c0_i32 = arith.constant 0 : i32
    %c0_i32_0 = arith.constant 0 : i32
    return %arg0, %c0_i32 : i32, i32
  }
}

</mosaic_0001>

<llo_original>
// kernel: tpu_custom_call.1
$region0: #{tpu_custom_call.1}
  #allocation0 [shape = 'u32[]', space=smem, size = 0x4, offset = 0x4, fixed_abs, tag = 'smem constant byte address 0x4 - core index']
  #allocation1 [shape = 'u32[144,128]{1,0:T(1,128)}', space=vmem, size = 0x12000, scoped, tag = 'internal scratch']
  %s0 = inlined_call_operand.hbm [shape: bf16[8,128], index: 0, kind: input, shape index: {}]
  %s1 = inlined_call_operand.hbm [shape: bf16[128,256], index: 1, kind: input, shape index: {}]
  %s2 = inlined_call_operand.hbm [shape: bf16[256,256], index: 2, kind: input, shape index: {}]
  %s3 = inlined_call_operand.hbm [shape: f32[8,256], index: 3, kind: input, shape index: {}]
  %s4 = inlined_call_operand.hbm [shape: bf16[8,256], index: 4, kind: output, shape index: {}]
  %s5 = sld [smem:[#allocation0]]
  $region42: #{tpu_custom_call.1} parent=0
    _
  %s7 = ssub.s32 1, %s5
  %s8 = scalar_select 0, %s7, %s5
  $region1: #{tpu_custom_call.1} parent=0
    #allocation2 [shape = 'u8[2048]{0}', space=vmem, size = 0x800, scoped, tag = 'input window, operand 0, single buffered']
    #allocation3 [shape = 's32[1]{0}', space=sflag, size = 0x4, scoped, tag = 'scoped memory for tpu_custom_call.1']
    #allocation4 [shape = 's32[1]{0}', space=sflag, size = 0x4, scoped, tag = 'scoped memory for tpu_custom_call.1']
    #allocation5 [shape = 'u8[65536]{0}', space=vmem, size = 0x10000, scoped, tag = 'input window, operand 1, single buffered']
    #allocation6 [shape = 's32[1]{0}', space=sflag, size = 0x4, scoped, tag = 'scoped memory for tpu_custom_call.1']
    #allocation7 [shape = 'u8[131072]{0}', space=vmem, size = 0x20000, scoped, tag = 'input window, operand 2, single buffered']
    #allocation8 [shape = 'u8[8192]{0}', space=vmem, size = 0x2000, scoped, tag = 'input window, operand 3, single buffered']
    #allocation9 [shape = 's32[1]{0}', space=sflag, size = 0x4, scoped, tag = 'scoped memory for tpu_custom_call.1']
    #allocation10 [shape = 'u8[4096]{0}', space=vmem, size = 0x1000, scoped, tag = 'output window, operand 0, single buffered']
    %9 = vsyncpa [#allocation3], 0
    %10 = vsyncpa [#allocation6], 0
    %11 = vsyncpa [#allocation9], 0
    %12 = vsyncpa [#allocation4], 0
    // Predicated region
    $region2: #{tpu_custom_call.1} parent=1 // pred_check
      _
    $region3: #{tpu_custom_call.1} parent=1 // pred_check_branch
      %14 = sbr.rel (0) target = $region5
    $region4: #{tpu_custom_call.1} parent=1 // pred_region
      %s16 = ssub.s32 64, 64
      %17 = vsyncadd [#allocation3], %s16
      %s19 = sshll.u32 [#allocation2], 4
      %s20 = int_to_ptr.vmem [resolvable:$true] %s19
      %22 = dma.hbm_to_vmem [thread:$0]  %s0, 64, %s20, [#allocation3]
    $region5: #{tpu_custom_call.1} parent=1 // pred_fallthru
      _
    // Predicated region
    $region6: #{tpu_custom_call.1} parent=1 // pred_check
      _
    $region7: #{tpu_custom_call.1} parent=1 // pred_check_branch
      %24 = sbr.rel (0) target = $region9
    $region8: #{tpu_custom_call.1} parent=1 // pred_region
      %s26 = ssub.s32 2048, 2048
      %27 = vsyncadd [#allocation6], %s26
      %s28 = sshll.u32 [#allocation5], 4
      %s29 = int_to_ptr.vmem [resolvable:$true] %s28
      %34 = dma.hbm_to_vmem [thread:$0]  %s1, 2048, %s29, [#allocation6], 128, 128, 8
    $region9: #{tpu_custom_call.1} parent=1 // pred_fallthru
      _
    // Predicated region
    $region10: #{tpu_custom_call.1} parent=1 // pred_check
      _
    $region11: #{tpu_custom_call.1} parent=1 // pred_check_branch
      %36 = sbr.rel (0) target = $region13
    $region12: #{tpu_custom_call.1} parent=1 // pred_region
      %s38 = ssub.s32 4096, 4096
      %39 = vsyncadd [#allocation6], %s38
      %s40 = sshll.u32 [#allocation7], 4
      %s41 = int_to_ptr.vmem [resolvable:$true] %s40
      %46 = dma.hbm_to_vmem [thread:$0]  %s2, 4096, %s41, [#allocation6], 128, 128, 8
    $region13: #{tpu_custom_call.1} parent=1 // pred_fallthru
      _
    // Predicated region
    $region14: #{tpu_custom_call.1} parent=1 // pred_check
      _
    $region15: #{tpu_custom_call.1} parent=1 // pred_check_branch
      %48 = sbr.rel (0) target = $region17
    $region16: #{tpu_custom_call.1} parent=1 // pred_region
      %s50 = ssub.s32 256, 256
      %51 = vsyncadd [#allocation9], %s50
      %s53 = sshll.u32 [#allocation8], 4
      %s54 = int_to_ptr.vmem [resolvable:$true] %s53
      %56 = dma.hbm_to_vmem [thread:$0]  %s3, 256, %s54, [#allocation9]
    $region17: #{tpu_custom_call.1} parent=1 // pred_fallthru
      _
    // Predicated region
    $region18: #{tpu_custom_call.1} parent=1 // pred_check
      _
    $region19: #{tpu_custom_call.1} parent=1 // pred_check_branch
      %58 = sbr.rel (0) target = $region21
    $region20: #{tpu_custom_call.1} parent=1 // pred_region
      %59 = dma.done [#allocation3], 64
    $region21: #{tpu_custom_call.1} parent=1 // pred_fallthru
      _
    // Predicated region
    $region22: #{tpu_custom_call.1} parent=1 // pred_check
      _
    $region23: #{tpu_custom_call.1} parent=1 // pred_check_branch
      %61 = sbr.rel (0) target = $region25
    $region24: #{tpu_custom_call.1} parent=1 // pred_region
      %62 = dma.done [#allocation6], 2048
    $region25: #{tpu_custom_call.1} parent=1 // pred_fallthru
      _
    // Predicated region
    $region26: #{tpu_custom_call.1} parent=1 // pred_check
      _
    $region27: #{tpu_custom_call.1} parent=1 // pred_check_branch
      %64 = sbr.rel (0) target = $region29
    $region28: #{tpu_custom_call.1} parent=1 // pred_region
      %65 = dma.done [#allocation6], 4096
    $region29: #{tpu_custom_call.1} parent=1 // pred_fallthru
      _
    // Predicated region
    $region30: #{tpu_custom_call.1} parent=1 // pred_check
      _
    $region31: #{tpu_custom_call.1} parent=1 // pred_check_branch
      %67 = sbr.rel (0) target = $region33
    $region32: #{tpu_custom_call.1} parent=1 // pred_region
      %68 = dma.done [#allocation9], 256
    $region33: #{tpu_custom_call.1} parent=1 // pred_fallthru
      _
    %v70 = vld [vmem:[#allocation8] ss:$8 sm:$0x3]
    %s71 = scalar_lea.vmem [#allocation8], 1
    %v72 = vld [vmem:[%s71] ss:$8 sm:$0x3]
    %s73 = scalar_lea.vmem [#allocation8], 2
    %v74 = vld [vmem:[%s73] ss:$8 sm:$0x3]
    %s75 = scalar_lea.vmem [#allocation8], 3
    %v76 = vld [vmem:[%s75] ss:$8 sm:$0x3]
    %v77 = vld [vmem:[#allocation2] sm:$0xf]
    %v78 = vld [vmem:[#allocation5] sm:$0xff]
    %v79 = vld [vmem:[#allocation5 + $0x8] sm:$0xff]
    %v80 = vld [vmem:[#allocation5 + $0x10] sm:$0xff]
    %v81 = vld [vmem:[#allocation5 + $0x18] sm:$0xff]
    %v82 = vld [vmem:[#allocation5 + $0x20] sm:$0xff]
    %v83 = vld [vmem:[#allocation5 + $0x28] sm:$0xff]
    %v84 = vld [vmem:[#allocation5 + $0x30] sm:$0xff]
    %v85 = vld [vmem:[#allocation5 + $0x38] sm:$0xff]
    %v86 = vld [vmem:[#allocation5 + $0x40] sm:$0xff]
    %v87 = vld [vmem:[#allocation5 + $0x48] sm:$0xff]
    %v88 = vld [vmem:[#allocation5 + $0x50] sm:$0xff]
    %v89 = vld [vmem:[#allocation5 + $0x58] sm:$0xff]
    %v90 = vld [vmem:[#allocation5 + $0x60] sm:$0xff]
    %v91 = vld [vmem:[#allocation5 + $0x68] sm:$0xff]
    %v92 = vld [vmem:[#allocation5 + $0x70] sm:$0xff]
    %v93 = vld [vmem:[#allocation5 + $0x78] sm:$0xff]
    %v95 = vlaneseq
    %v96 = vshrl.u32 %v95, 7
    %v97 = vsub.s32 0, %v96
    %v98 = vrot.slane %v70, %v97
    %v99 = vlaneseq
    %v100 = vshrl.u32 %v99, 7
    %v101 = vsub.s32 1, %v100
    %v102 = vrot.slane %v70, %v101
    %v121 = vunpack.c.l.b16 %v78
    %v122 = vunpack.c.h.b16 %v78
    %v123 = vunpack.c.l.b16 %v79
    %v124 = vunpack.c.h.b16 %v79
    %v125 = vunpack.c.l.b16 %v80
    %v126 = vunpack.c.h.b16 %v80
    %v127 = vunpack.c.l.b16 %v81
    %v128 = vunpack.c.h.b16 %v81
    %v129 = vunpack.c.l.b16 %v82
    %v130 = vunpack.c.h.b16 %v82
    %v131 = vunpack.c.l.b16 %v83
    %v132 = vunpack.c.h.b16 %v83
    %v133 = vunpack.c.l.b16 %v84
    %v134 = vunpack.c.h.b16 %v84
    %v135 = vunpack.c.l.b16 %v85
    %v136 = vunpack.c.h.b16 %v85
    %v137 = vunpack.c.l.b16 %v86
    %v138 = vunpack.c.h.b16 %v86
    %v139 = vunpack.c.l.b16 %v87
    %v140 = vunpack.c.h.b16 %v87
    %v141 = vunpack.c.l.b16 %v88
    %v142 = vunpack.c.h.b16 %v88
    %v143 = vunpack.c.l.b16 %v89
    %v144 = vunpack.c.h.b16 %v89
    %v145 = vunpack.c.l.b16 %v90
    %v146 = vunpack.c.h.b16 %v90
    %v147 = vunpack.c.l.b16 %v91
    %v148 = vunpack.c.h.b16 %v91
    %v149 = vunpack.c.l.b16 %v92
    %v150 = vunpack.c.h.b16 %v92
    %v151 = vunpack.c.l.b16 %v93
    %v152 = vunpack.c.h.b16 %v93
    %v153 = vpack.c.b16 %v123, %v121
    %v154 = vpack.c.b16 %v124, %v122
    %v155 = vpack.c.b16 %v127, %v125
    %v156 = vpack.c.b16 %v128, %v126
    %v157 = vpack.c.b16 %v131, %v129
    %v158 = vpack.c.b16 %v132, %v130
    %v159 = vpack.c.b16 %v135, %v133
    %v160 = vpack.c.b16 %v136, %v134
    %v161 = vpack.c.b16 %v139, %v137
    %v162 = vpack.c.b16 %v140, %v138
    %v163 = vpack.c.b16 %v143, %v141
    %v164 = vpack.c.b16 %v144, %v142
    %v165 = vpack.c.b16 %v147, %v145
    %v166 = vpack.c.b16 %v148, %v146
    %v167 = vpack.c.b16 %v151, %v149
    %v168 = vpack.c.b16 %v152, %v150
    %185 = vmatprep.subr.bf16.mxu0 %v154
    %186 = vmatpush1.bf16.msra.mxu0 %v153
    %187 = vmatprep.subr.bf16.mxu0 %v156
    %188 = vmatpush1.bf16.msra.mxu0 %v155
    %189 = vmatprep.subr.bf16.mxu0 %v158
    %190 = vmatpush1.bf16.msra.mxu0 %v157
    %191 = vmatprep.subr.bf16.mxu0 %v160
    %192 = vmatpush1.bf16.msra.mxu0 %v159
    %193 = vmatprep.subr.bf16.mxu0 %v162
    %194 = vmatpush1.bf16.msra.mxu0 %v161
    %195 = vmatprep.subr.bf16.mxu0 %v164
    %196 = vmatpush1.bf16.msra.mxu0 %v163
    %197 = vmatprep.subr.bf16.mxu0 %v166
    %198 = vmatpush1.bf16.msra.mxu0 %v165
    %199 = vmatprep.subr.bf16.mxu0 %v168
    %200 = vmatpush1.bf16.msra.mxu0 %v167
    %201 = vmatprep.subr.bf16.mxu0 0
    %202 = vmatpush1.bf16.msra.mxu0 0
    %203 = vmatprep.subr.bf16.mxu0 0
    %204 = vmatpush1.bf16.msra.mxu0 0
    %205 = vmatprep.subr.bf16.mxu0 0
    %206 = vmatpush1.bf16.msra.mxu0 0
    %207 = vmatprep.subr.bf16.mxu0 0
    %208 = vmatpush1.bf16.msra.mxu0 0
    %209 = vmatprep.subr.bf16.mxu0 0
    %210 = vmatpush1.bf16.msra.mxu0 0
    %211 = vmatprep.subr.bf16.mxu0 0
    %212 = vmatpush1.bf16.msra.mxu0 0
    %213 = vmatprep.subr.bf16.mxu0 0
    %214 = vmatpush1.bf16.msra.mxu0 0
    %215 = vmatprep.subr.bf16.mxu0 0
    %216 = vmatpush1.bf16.msra.mxu0 0
    %217 = vmatprep.mubr.bf16.mxu0 0
    %218 = vmatmul.mubr.bf16.gmra.mrb[0].mxu0 %v77
    %v219 = vpop.f32.mrb[0].mxu0
    %v220 = vadd.f32 %v98, %v219
    %v221 = vpop.f32.mrb[0].mxu0
    %v222 = vadd.f32 %v102, %v221
    %v223 = vpop.f32.mrb[0].mxu0
    %v224 = vpop.f32.mrb[0].mxu0
    %225 = vdwg.mxu0
    %v226 = vmul.f32 %v220, 0.5
    %v227 = vmul.f32 %v222, 0.5
    %v228 = vmul.f32 %v220, 0.044715
    %v229 = vmul.f32 %v222, 0.044715
    %v230 = vmul.f32 %v228, %v220
    %v231 = vmul.f32 %v229, %v222
    %v232 = vmul.f32 %v230, %v220
    %v233 = vmul.f32 %v231, %v222
    %v234 = vadd.f32 %v220, %v232
    %v235 = vadd.f32 %v222, %v233
    %v236 = vmul.f32 %v234, 0.7978846
    %v237 = vmul.f32 %v235, 0.7978846
    %v238 = vtanh.pop %v236
    %v239 = vtanh.pop %v237
    %v240 = vadd.f32 %v238, 1.0
    %v241 = vadd.f32 %v239, 1.0
    %v242 = vmul.f32 %v226, %v240
    %v243 = vmul.f32 %v227, %v241
    %v244 = vpack.c.bf16 %v242, %v242
    %v245 = vpack.c.bf16 %v243, %v243
    %v246 = vld [vmem:[#allocation7] sm:$0xff]
    %v247 = vld [vmem:[#allocation7 + $0x8] sm:$0xff]
    %v248 = vld [vmem:[#allocation7 + $0x10] sm:$0xff]
    %v249 = vld [vmem:[#allocation7 + $0x18] sm:$0xff]
    %v250 = vld [vmem:[#allocation7 + $0x20] sm:$0xff]
    %v251 = vld [vmem:[#allocation7 + $0x28] sm:$0xff]
    %v252 = vld [vmem:[#allocation7 + $0x30] sm:$0xff]
    %v253 = vld [vmem:[#allocation7 + $0x38] sm:$0xff]
    %v254 = vld [vmem:[#allocation7 + $0x40] sm:$0xff]
    %v255 = vld [vmem:[#allocation7 + $0x48] sm:$0xff]
    %v256 = vld [vmem:[#allocation7 + $0x50] sm:$0xff]
    %v257 = vld [vmem:[#allocation7 + $0x58] sm:$0xff]
    %v258 = vld [vmem:[#allocation7 + $0x60] sm:$0xff]
    %v259 = vld [vmem:[#allocation7 + $0x68] sm:$0xff]
    %v260 = vld [vmem:[#allocation7 + $0x70] sm:$0xff]
    %v261 = vld [vmem:[#allocation7 + $0x78] sm:$0xff]
    %v262 = vld [vmem:[#allocation7 + $0x80] sm:$0xff]
    %v263 = vld [vmem:[#allocation7 + $0x88] sm:$0xff]
    %v264 = vld [vmem:[#allocation7 + $0x90] sm:$0xff]
    %v265 = vld [vmem:[#allocation7 + $0x98] sm:$0xff]
    %v266 = vld [vmem:[#allocation7 + $0xa0] sm:$0xff]
    %v267 = vld [vmem:[#allocation7 + $0xa8] sm:$0xff]
    %v268 = vld [vmem:[#allocation7 + $0xb0] sm:$0xff]
    %v269 = vld [vmem:[#allocation7 + $0xb8] sm:$0xff]
    %v270 = vld [vmem:[#allocation7 + $0xc0] sm:$0xff]
    %v271 = vld [vmem:[#allocation7 + $0xc8] sm:$0xff]
    %v272 = vld [vmem:[#allocation7 + $0xd0] sm:$0xff]
    %v273 = vld [vmem:[#allocation7 + $0xd8] sm:$0xff]
    %v274 = vld [vmem:[#allocation7 + $0xe0] sm:$0xff]
    %v275 = vld [vmem:[#allocation7 + $0xe8] sm:$0xff]
    %v276 = vld [vmem:[#allocation7 + $0xf0] sm:$0xff]
    %v277 = vld [vmem:[#allocation7 + $0xf8] sm:$0xff]
    %v279 = vlaneseq
    %v280 = vshrl.u32 %v279, 7
    %v281 = vsub.s32 0, %v280
    %v282 = vrot.slane %v72, %v281
    %v283 = vlaneseq
    %v284 = vshrl.u32 %v283, 7
    %v285 = vsub.s32 1, %v284
    %v286 = vrot.slane %v72, %v285
    %v321 = vunpack.c.l.b16 %v246
    %v322 = vunpack.c.h.b16 %v246
    %v323 = vunpack.c.l.b16 %v247
    %v324 = vunpack.c.h.b16 %v247
    %v325 = vunpack.c.l.b16 %v248
    %v326 = vunpack.c.h.b16 %v248
    %v327 = vunpack.c.l.b16 %v249
    %v328 = vunpack.c.h.b16 %v249
    %v329 = vunpack.c.l.b16 %v250
    %v330 = vunpack.c.h.b16 %v250
    %v331 = vunpack.c.l.b16 %v251
    %v332 = vunpack.c.h.b16 %v251
    %v333 = vunpack.c.l.b16 %v252
    %v334 = vunpack.c.h.b16 %v252
    %v335 = vunpack.c.l.b16 %v253
    %v336 = vunpack.c.h.b16 %v253
    %v337 = vunpack.c.l.b16 %v254
    %v338 = vunpack.c.h.b16 %v254
    %v339 = vunpack.c.l.b16 %v255
    %v340 = vunpack.c.h.b16 %v255
    %v341 = vunpack.c.l.b16 %v256
    %v342 = vunpack.c.h.b16 %v256
    %v343 = vunpack.c.l.b16 %v257
    %v344 = vunpack.c.h.b16 %v257
    %v345 = vunpack.c.l.b16 %v258
    %v346 = vunpack.c.h.b16 %v258
    %v347 = vunpack.c.l.b16 %v259
    %v348 = vunpack.c.h.b16 %v259
    %v349 = vunpack.c.l.b16 %v260
    %v350 = vunpack.c.h.b16 %v260
    %v351 = vunpack.c.l.b16 %v261
    %v352 = vunpack.c.h.b16 %v261
    %v353 = vunpack.c.l.b16 %v262
    %v354 = vunpack.c.h.b16 %v262
    %v355 = vunpack.c.l.b16 %v263
    %v356 = vunpack.c.h.b16 %v263
    %v357 = vunpack.c.l.b16 %v264
    %v358 = vunpack.c.h.b16 %v264
    %v359 = vunpack.c.l.b16 %v265
    %v360 = vunpack.c.h.b16 %v265
    %v361 = vunpack.c.l.b16 %v266
    %v362 = vunpack.c.h.b16 %v266
    %v363 = vunpack.c.l.b16 %v267
    %v364 = vunpack.c.h.b16 %v267
    %v365 = vunpack.c.l.b16 %v268
    %v366 = vunpack.c.h.b16 %v268
    %v367 = vunpack.c.l.b16 %v269
    %v368 = vunpack.c.h.b16 %v269
    %v369 = vunpack.c.l.b16 %v270
    %v370 = vunpack.c.h.b16 %v270
    %v371 = vunpack.c.l.b16 %v271
    %v372 = vunpack.c.h.b16 %v271
    %v373 = vunpack.c.l.b16 %v272
    %v374 = vunpack.c.h.b16 %v272
    %v375 = vunpack.c.l.b16 %v273
    %v376 = vunpack.c.h.b16 %v273
    %v377 = vunpack.c.l.b16 %v274
    %v378 = vunpack.c.h.b16 %v274
    %v379 = vunpack.c.l.b16 %v275
    %v380 = vunpack.c.h.b16 %v275
    %v381 = vunpack.c.l.b16 %v276
    %v382 = vunpack.c.h.b16 %v276
    %v383 = vunpack.c.l.b16 %v277
    %v384 = vunpack.c.h.b16 %v277
    %v385 = vpack.c.b16 %v323, %v321
    %v386 = vpack.c.b16 %v324, %v322
    %v387 = vpack.c.b16 %v327, %v325
    %v388 = vpack.c.b16 %v328, %v326
    %v389 = vpack.c.b16 %v331, %v329
    %v390 = vpack.c.b16 %v332, %v330
    %v391 = vpack.c.b16 %v335, %v333
    %v392 = vpack.c.b16 %v336, %v334
    %v393 = vpack.c.b16 %v339, %v337
    %v394 = vpack.c.b16 %v340, %v338
    %v395 = vpack.c.b16 %v343, %v341
    %v396 = vpack.c.b16 %v344, %v342
    %v397 = vpack.c.b16 %v347, %v345
    %v398 = vpack.c.b16 %v348, %v346
    %v399 = vpack.c.b16 %v351, %v349
    %v400 = vpack.c.b16 %v352, %v350
    %v401 = vpack.c.b16 %v355, %v353
    %v402 = vpack.c.b16 %v356, %v354
    %v403 = vpack.c.b16 %v359, %v357
    %v404 = vpack.c.b16 %v360, %v358
    %v405 = vpack.c.b16 %v363, %v361
    %v406 = vpack.c.b16 %v364, %v362
    %v407 = vpack.c.b16 %v367, %v365
    %v408 = vpack.c.b16 %v368, %v366
    %v409 = vpack.c.b16 %v371, %v369
    %v410 = vpack.c.b16 %v372, %v370
    %v411 = vpack.c.b16 %v375, %v373
    %v412 = vpack.c.b16 %v376, %v374
    %v413 = vpack.c.b16 %v379, %v377
    %v414 = vpack.c.b16 %v380, %v378
    %v415 = vpack.c.b16 %v383, %v381
    %v416 = vpack.c.b16 %v384, %v382
    %449 = vmatprep.subr.bf16.mxu0 %v386
    %450 = vmatpush1.bf16.msra.mxu0 %v385
    %451 = vmatprep.subr.bf16.mxu0 %v388
    %452 = vmatpush1.bf16.msra.mxu0 %v387
    %453 = vmatprep.subr.bf16.mxu0 %v390
    %454 = vmatpush1.bf16.msra.mxu0 %v389
    %455 = vmatprep.subr.bf16.mxu0 %v392
    %456 = vmatpush1.bf16.msra.mxu0 %v391
    %457 = vmatprep.subr.bf16.mxu0 %v394
    %458 = vmatpush1.bf16.msra.mxu0 %v393
    %459 = vmatprep.subr.bf16.mxu0 %v396
    %460 = vmatpush1.bf16.msra.mxu0 %v395
    %461 = vmatprep.subr.bf16.mxu0 %v398
    %462 = vmatpush1.bf16.msra.mxu0 %v397
    %463 = vmatprep.subr.bf16.mxu0 %v400
    %464 = vmatpush1.bf16.msra.mxu0 %v399
    %465 = vmatprep.subr.bf16.mxu0 %v402
    %466 = vmatpush1.bf16.msra.mxu0 %v401
    %467 = vmatprep.subr.bf16.mxu0 %v404
    %468 = vmatpush1.bf16.msra.mxu0 %v403
    %469 = vmatprep.subr.bf16.mxu0 %v406
    %470 = vmatpush1.bf16.msra.mxu0 %v405
    %471 = vmatprep.subr.bf16.mxu0 %v408
    %472 = vmatpush1.bf16.msra.mxu0 %v407
    %473 = vmatprep.subr.bf16.mxu0 %v410
    %474 = vmatpush1.bf16.msra.mxu0 %v409
    %475 = vmatprep.subr.bf16.mxu0 %v412
    %476 = vmatpush1.bf16.msra.mxu0 %v411
    %477 = vmatprep.subr.bf16.mxu0 %v414
    %478 = vmatpush1.bf16.msra.mxu0 %v413
    %479 = vmatprep.subr.bf16.mxu0 %v416
    %480 = vmatpush1.bf16.msra.mxu0 %v415
    %481 = vmatprep.mubr.bf16.mxu0 %v245
    %482 = vmatmul.mubr.bf16.gmra.mrb[0].mxu0 %v244
    %v483 = vpop.f32.mrb[0].mxu0
    %v484 = vadd.f32 %v282, %v483
    %v485 = vpop.f32.mrb[0].mxu0
    %v486 = vadd.f32 %v286, %v485
    %v487 = vpop.f32.mrb[0].mxu0
    %v488 = vpop.f32.mrb[0].mxu0
    %489 = vdwg.mxu0
    %v490 = vadd.f32 %v484, %v220
    %v491 = vadd.f32 %v486, %v222
    %v492 = vadd.f32 %v490, %v491
    %493 = vadd.xlane.f32.xlu0 %v492
    %v494 = vpop.xlane.xlu0 %493
    %v495 = vrcp.pop 256.0
    %v496 = vmul.f32 %v494, %v495
    %v497 = vsub.f32 %v490, %v496
    %v498 = vsub.f32 %v491, %v496
    %v499 = vmul.f32 %v497, %v497
    %v500 = vmul.f32 %v498, %v498
    %v501 = vadd.f32 %v499, %v500
    %502 = vadd.xlane.f32.xlu0 %v501
    %v503 = vpop.xlane.xlu0 %502
    %v504 = vmul.f32 %v503, %v495
    %v505 = vadd.f32 %v504, 1e-05
    %v506 = vrsqrt.pop %v505
    %v507 = vmul.f32 %v497, %v506
    %v508 = vmul.f32 %v498, %v506
    %v510 = vlaneseq
    %v511 = vshrl.u32 %v510, 7
    %v512 = vsub.s32 0, %v511
    %v513 = vrot.slane %v74, %v512
    %v514 = vlaneseq
    %v515 = vshrl.u32 %v514, 7
    %v516 = vsub.s32 1, %v515
    %v517 = vrot.slane %v74, %v516
    %v520 = vmul.f32 %v507, %v513
    %v521 = vmul.f32 %v508, %v517
    %v523 = vlaneseq
    %v524 = vshrl.u32 %v523, 7
    %v525 = vsub.s32 0, %v524
    %v526 = vrot.slane %v76, %v525
    %v527 = vlaneseq
    %v528 = vshrl.u32 %v527, 7
    %v529 = vsub.s32 1, %v528
    %v530 = vrot.slane %v76, %v529
    %v533 = vadd.f32 %v520, %v526
    %v534 = vadd.f32 %v521, %v530
    %v535 = vpack.c.bf16 %v533, %v533
    %v536 = vpack.c.bf16 %v534, %v534
    %v539 = vunpack.c.l.b16 %v535
    %v540 = vunpack.c.l.b16 %v536
    %v541 = vpack.c.b16 %v540, %v539
    %543 = vst [vmem:[#allocation10] sm:$0xff] %v541
    // Predicated region
    $region34: #{tpu_custom_call.1} parent=1 // pred_check
      _
    $region35: #{tpu_custom_call.1} parent=1 // pred_check_branch
      %545 = sbr.rel (0) target = $region37
    $region36: #{tpu_custom_call.1} parent=1 // pred_region
      %s547 = ssub.s32 128, 128
      %548 = vsyncadd [#allocation4], %s547
      %s550 = sshll.u32 [#allocation10], 4
      %s551 = int_to_ptr.vmem [resolvable:$true] %s550
      %553 = dma.vmem_to_hbm [thread:$0]  %s551, 128, %s4, [#allocation4]
    $region37: #{tpu_custom_call.1} parent=1 // pred_fallthru
      _
    // Predicated region
    $region38: #{tpu_custom_call.1} parent=1 // pred_check
      _
    $region39: #{tpu_custom_call.1} parent=1 // pred_check_branch
      %555 = sbr.rel (0) target = $region41
    $region40: #{tpu_custom_call.1} parent=1 // pred_region
      %556 = dma.done [#allocation4], 128
    $region41: #{tpu_custom_call.1} parent=1 // pred_fallthru
      _
    %557 = vsyncpa [#allocation3], 1
    %558 = vsyncpa [#allocation6], 1
    %559 = vsyncpa [#allocation9], 1
    %560 = vsyncpa [#allocation4], 1

</llo_original>
